<compile_context>
chip_gen: v7x
topology: tpu7x:2x2x1
jax: 0.10.0
libtpu: 0.0.40
codegen_flags: <defaults>
</compile_context>

<pallas_src>
import jax
import jax.numpy as jnp
from jax.experimental import pallas as pl
from jax.experimental.pallas import tpu as pltpu


def _round_up(x, m):
    return (x + m - 1) // m * m


def _two_mlp_head_kernel(x_ref, w6_ref, b6_ref, w7_ref, b7_ref, o_ref, acc_ref):
    k = pl.program_id(1)

    @pl.when(k == 0)
    def _():
        acc_ref[...] = jnp.zeros_like(acc_ref)

    # fc6 partial contraction for this K slab (MXU, f32 accumulation).  The
    # activations are cast to the weight dtype so a bf16 param_dtype gives a
    # genuine bf16 x bf16 MXU pass (no-op cast when weights are f32).
    acc_ref[...] += jnp.dot(
        x_ref[...].astype(w6_ref.dtype), w6_ref[...],
        preferred_element_type=jnp.float32,
    )

    @pl.when(k == pl.num_programs(1) - 1)
    def _():
        # fc6 epilogue: bias + ReLU (f32 VPU).
        h = jnp.maximum(acc_ref[...] + b6_ref[...], 0.0)
        # fc7 fused: matmul in the weight dtype, f32 accumulation + epilogue.
        o = jnp.dot(h.astype(w7_ref.dtype), w7_ref[...],
                    preferred_element_type=jnp.float32)
        o = jnp.maximum(o + b7_ref[...], 0.0)
        o_ref[...] = o.astype(o_ref.dtype)


def two_mlp_head(x_nchw, w6, b6, w7, b7, *,
                 block_rows=128, block_k=512, param_dtype=None):
    """x_nchw: (N, C, H, W). Weights are (in, out); returns (N, rep).

    param_dtype: optional dtype (e.g. jnp.bfloat16) to cast w6/w7 to at the
    pallas_call boundary; accumulation and the bias/ReLU epilogue stay f32.
    """
    n = x_nchw.shape[0]
    x_flat = x_nchw.reshape(n, -1)           # flatten(start_dim=1)
    in_feat = x_flat.shape[1]
    rep = w6.shape[1]
    assert w6.shape == (in_feat, rep)
    assert w7.shape == (rep, rep)
    assert b6.shape == (rep,) and b7.shape == (rep,)

    if param_dtype is not None:
        w6 = w6.astype(param_dtype)
        w7 = w7.astype(param_dtype)

    # --- tile sizes / padded extents ------------------------------------
    tm = min(block_rows, _round_up(n, 8))        # row tile (sublane granule)
    n_pad = _round_up(n, tm)
    rep_pad = _round_up(rep, 128)                # lane granule
    tk = min(block_k, _round_up(in_feat, 128))   # fc6 contraction tile
    k_pad = _round_up(in_feat, tk)

    # --- zero padding (exact-zero contribution, sliced off at the end) ---
    x_p = jnp.pad(x_flat, ((0, n_pad - n), (0, k_pad - in_feat)))
    w6_p = jnp.pad(w6, ((0, k_pad - in_feat), (0, rep_pad - rep)))
    w7_p = jnp.pad(w7, ((0, rep_pad - rep), (0, rep_pad - rep)))
    b6_p = jnp.pad(b6, (0, rep_pad - rep)).astype(jnp.float32).reshape(1, rep_pad)
    b7_p = jnp.pad(b7, (0, rep_pad - rep)).astype(jnp.float32).reshape(1, rep_pad)

    grid = (n_pad // tm, k_pad // tk)
    num_row_tiles = grid[0]

    w_item = jnp.dtype(w6_p.dtype).itemsize
    x_item = jnp.dtype(x_p.dtype).itemsize
    cost = pl.CostEstimate(
        flops=2 * n_pad * k_pad * rep_pad + 2 * n_pad * rep_pad * rep_pad,
        transcendentals=0,
        bytes_accessed=(
            n_pad * k_pad * x_item                       # activations read
            + num_row_tiles * k_pad * rep_pad * w_item   # w6 re-streamed per row tile
            + rep_pad * rep_pad * w_item                 # w7 (resident)
            + 2 * rep_pad * 4                            # biases
            + n_pad * rep_pad * x_item                   # output write
        ),
    )

    out = pl.pallas_call(
        _two_mlp_head_kernel,
        out_shape=jax.ShapeDtypeStruct((n_pad, rep_pad), x_flat.dtype),
        grid_spec=pltpu.PrefetchScalarGridSpec(
            num_scalar_prefetch=0,
            grid=grid,
            in_specs=[
                # activations: stream (row tile, K slab)
                pl.BlockSpec((tm, tk), lambda i, k: (i, k)),
                # fc6 weights: stream K slabs, same slab for every row tile
                pl.BlockSpec((tk, rep_pad), lambda i, k: (k, 0)),
                # biases / fc7 weights: constant block index -> VMEM resident
                pl.BlockSpec((1, rep_pad), lambda i, k: (0, 0)),
                pl.BlockSpec((rep_pad, rep_pad), lambda i, k: (0, 0)),
                pl.BlockSpec((1, rep_pad), lambda i, k: (0, 0)),
            ],
            out_specs=pl.BlockSpec((tm, rep_pad), lambda i, k: (i, 0)),
            scratch_shapes=[pltpu.VMEM((tm, rep_pad), jnp.float32)],
        ),
        compiler_params=pltpu.CompilerParams(
            dimension_semantics=("parallel", "arbitrary")),
        cost_estimate=cost,
    )(x_p, w6_p, b6_p, w7_p, b7_p)

    return out[:n, :rep]


def _reference(x_nchw, w6, b6, w7, b7):
    x = x_nchw.reshape(x_nchw.shape[0], -1)
    x = jnp.maximum(x @ w6 + b6, 0.0)
    x = jnp.maximum(x @ w7 + b7, 0.0)
    return x


if __name__ == "__main__":
    key = jax.random.PRNGKey(0)
    k_x, k_w6, k_b6, k_w7, k_b7 = jax.random.split(key, 5)

    # Shapes consistent with the module: in_channels = C*H*W = 4*16*16 = 1024,
    # representation_size = 128.  With block_k=512 this exercises the K-tiled
    # accumulator path (2 K steps).
    N, C, H, W = 2, 4, 16, 16
    in_channels = C * H * W
    representation_size = 128

    x = jax.random.normal(k_x, (N, C, H, W), dtype=jnp.float32)
    # Deterministic synthetic parameters (not a checkpoint load).
    w6 = jax.random.normal(k_w6, (in_channels, representation_size),
                           dtype=jnp.float32) * 0.02
    b6 = jax.random.normal(k_b6, (representation_size,),
                           dtype=jnp.float32) * 0.02
    w7 = jax.random.normal(k_w7, (representation_size, representation_size),
                           dtype=jnp.float32) * 0.02
    b7 = jax.random.normal(k_b7, (representation_size,),
                           dtype=jnp.float32) * 0.02

    ref = _reference(x, w6, b6, w7, b7)

    # f32 path (exact dtype match vs reference).
    out = jax.block_until_ready(two_mlp_head(x, w6, b6, w7, b7))
    assert out.shape == (N, representation_size)
    assert jnp.allclose(out, ref, atol=1e-4, rtol=1e-4)

    # bf16 weight/activation MXU path (HBM-bandwidth optimization for
    # v6e/v7x); f32 accumulation keeps the error small but looser than f32.
    out_bf16 = jax.block_until_ready(
        two_mlp_head(x, w6, b6, w7, b7, param_dtype=jnp.bfloat16))
    assert out_bf16.shape == (N, representation_size)
    assert jnp.allclose(out_bf16, ref, atol=5e-2, rtol=5e-2)

    print("KERNEL_OK")
</pallas_src>

<mosaic_0001>
module attributes {stable_mosaic.version = 11 : i64} {
  func.func @_two_mlp_head_kernel(%arg0: i32, %arg1: i32, %arg2: memref<8x512xf32, #tpu.memory_space<vmem>>, %arg3: memref<512x128xf32, #tpu.memory_space<vmem>>, %arg4: memref<1x128xf32, #tpu.memory_space<vmem>>, %arg5: memref<128x128xf32, #tpu.memory_space<vmem>>, %arg6: memref<1x128xf32, #tpu.memory_space<vmem>>, %arg7: memref<8x128xf32, #tpu.memory_space<vmem>>, %arg8: memref<8x128xf32, #tpu.memory_space<vmem>>) attributes {dimension_semantics = [#tpu.dimension_semantics<parallel>, #tpu.dimension_semantics<arbitrary>], iteration_bounds = array<i64: 1, 2>, scalar_prefetch = 0 : i64, scratch_operands = 1 : i64, tpu.core_type = #tpu.core_type<tc>, window_params = [{transform_indices = @transform_0, window_bounds = array<i64: 8, 512>}, {transform_indices = @transform_1, window_bounds = array<i64: 512, 128>}, {pipeline_mode = #tpu.pipeline_mode<synchronous>, transform_indices = @transform_2, window_bounds = array<i64: 1, 128>}, {pipeline_mode = #tpu.pipeline_mode<synchronous>, transform_indices = @transform_3, window_bounds = array<i64: 128, 128>}, {pipeline_mode = #tpu.pipeline_mode<synchronous>, transform_indices = @transform_4, window_bounds = array<i64: 1, 128>}, {transform_indices = @transform_5, window_bounds = array<i64: 8, 128>}]} {
    %c0_i32 = arith.constant 0 : i32
    %0 = arith.cmpi eq, %arg1, %c0_i32 : i32
    %1 = arith.extui %0 : i1 to i32
    %c0_i32_0 = arith.constant 0 : i32
    %2 = arith.cmpi ne, %1, %c0_i32_0 : i32
    scf.if %2 {
      %cst_9 = arith.constant 0.000000e+00 : f32
      %12 = vector.broadcast %cst_9 : f32 to vector<8x128xf32>
      %c0_10 = arith.constant 0 : index
      %c0_11 = arith.constant 0 : index
      %13 = vector.load %arg8[%c0_10, %c0_11] : memref<8x128xf32, #tpu.memory_space<vmem>>, vector<8x128xf32>
      tpu.vector_store %arg8[%c0_10, %c0_11], %12 {strides = array<i32>} : memref<8x128xf32, #tpu.memory_space<vmem>>, vector<8x128xf32>,
    } else {
    }
    %c0 = arith.constant 0 : index
    %c0_1 = arith.constant 0 : index
    %3 = vector.load %arg8[%c0, %c0_1] : memref<8x128xf32, #tpu.memory_space<vmem>>, vector<8x128xf32>
    %c0_2 = arith.constant 0 : index
    %c0_3 = arith.constant 0 : index
    %4 = vector.load %arg2[%c0_2, %c0_3] : memref<8x512xf32, #tpu.memory_space<vmem>>, vector<8x512xf32>
    %c0_4 = arith.constant 0 : index
    %c0_5 = arith.constant 0 : index
    %5 = vector.load %arg3[%c0_4, %c0_5] : memref<512x128xf32, #tpu.memory_space<vmem>>, vector<512x128xf32>
    %cst = arith.constant dense<0.000000e+00> : vector<8x128xf32>
    %6 = tpu.matmul %4, %5, %cst {dimension_numbers = #tpu.dot_dimension_numbers<[1], [0], [0], [1], [0, 0, 1, 1], [], []>} : vector<8x512xf32>, vector<512x128xf32>, vector<8x128xf32> -> vector<8x128xf32>
    %7 = arith.addf %3, %6 : vector<8x128xf32>
    %c0_6 = arith.constant 0 : index
    %c0_7 = arith.constant 0 : index
    %8 = vector.load %arg8[%c0_6, %c0_7] : memref<8x128xf32, #tpu.memory_space<vmem>>, vector<8x128xf32>
    tpu.vector_store %arg8[%c0_6, %c0_7], %7 {strides = array<i32>} : memref<8x128xf32, #tpu.memory_space<vmem>>, vector<8x128xf32>,
    %c1_i32 = arith.constant 1 : i32
    %9 = arith.cmpi eq, %arg1, %c1_i32 : i32
    %10 = arith.extui %9 : i1 to i32
    %c0_i32_8 = arith.constant 0 : i32
    %11 = arith.cmpi ne, %10, %c0_i32_8 : i32
    scf.if %11 {
      %c0_9 = arith.constant 0 : index
      %c0_10 = arith.constant 0 : index
      %12 = vector.load %arg8[%c0_9, %c0_10] : memref<8x128xf32, #tpu.memory_space<vmem>>, vector<8x128xf32>
      %c0_11 = arith.constant 0 : index
      %c0_12 = arith.constant 0 : index
      %13 = vector.load %arg4[%c0_11, %c0_12] : memref<1x128xf32, #tpu.memory_space<vmem>>, vector<1x128xf32>
      %14 = vector.broadcast %13 : vector<1x128xf32> to vector<8x128xf32>
      %15 = arith.addf %12, %14 : vector<8x128xf32>
      %cst_13 = arith.constant 0.000000e+00 : f32
      %16 = vector.broadcast %cst_13 : f32 to vector<8x128xf32>
      %17 = arith.maximumf %15, %16 : vector<8x128xf32>
      %c0_14 = arith.constant 0 : index
      %c0_15 = arith.constant 0 : index
      %18 = vector.load %arg5[%c0_14, %c0_15] : memref<128x128xf32, #tpu.memory_space<vmem>>, vector<128x128xf32>
      %cst_16 = arith.constant dense<0.000000e+00> : vector<8x128xf32>
      %19 = tpu.matmul %17, %18, %cst_16 {dimension_numbers = #tpu.dot_dimension_numbers<[1], [0], [0], [1], [0, 0, 1, 1], [], []>} : vector<8x128xf32>, vector<128x128xf32>, vector<8x128xf32> -> vector<8x128xf32>
      %c0_17 = arith.constant 0 : index
      %c0_18 = arith.constant 0 : index
      %20 = vector.load %arg6[%c0_17, %c0_18] : memref<1x128xf32, #tpu.memory_space<vmem>>, vector<1x128xf32>
      %21 = vector.broadcast %20 : vector<1x128xf32> to vector<8x128xf32>
      %22 = arith.addf %19, %21 : vector<8x128xf32>
      %cst_19 = arith.constant 0.000000e+00 : f32
      %23 = vector.broadcast %cst_19 : f32 to vector<8x128xf32>
      %24 = arith.maximumf %22, %23 : vector<8x128xf32>
      %c0_20 = arith.constant 0 : index
      %c0_21 = arith.constant 0 : index
      %25 = vector.load %arg7[%c0_20, %c0_21] : memref<8x128xf32, #tpu.memory_space<vmem>>, vector<8x128xf32>
      tpu.vector_store %arg7[%c0_20, %c0_21], %24 {strides = array<i32>} : memref<8x128xf32, #tpu.memory_space<vmem>>, vector<8x128xf32>,
    } else {
    }
    return
  }
  func.func @transform_0(%arg0: i32, %arg1: i32) -> (i32, i32) {
    %c0_i32 = arith.constant 0 : i32
    return %arg0, %arg1 : i32, i32
  }
  func.func @transform_1(%arg0: i32, %arg1: i32) -> (i32, i32) {
    %c0_i32 = arith.constant 0 : i32
    %c0_i32_0 = arith.constant 0 : i32
    return %arg1, %c0_i32 : i32, i32
  }
  func.func @transform_2(%arg0: i32, %arg1: i32) -> (i32, i32) {
    %c0_i32 = arith.constant 0 : i32
    %c0_i32_0 = arith.constant 0 : i32
    %c0_i32_1 = arith.constant 0 : i32
    return %c0_i32, %c0_i32_0 : i32, i32
  }
  func.func @transform_3(%arg0: i32, %arg1: i32) -> (i32, i32) {
    %c0_i32 = arith.constant 0 : i32
    %c0_i32_0 = arith.constant 0 : i32
    %c0_i32_1 = arith.constant 0 : i32
    return %c0_i32, %c0_i32_0 : i32, i32
  }
  func.func @transform_4(%arg0: i32, %arg1: i32) -> (i32, i32) {
    %c0_i32 = arith.constant 0 : i32
    %c0_i32_0 = arith.constant 0 : i32
    %c0_i32_1 = arith.constant 0 : i32
    return %c0_i32, %c0_i32_0 : i32, i32
  }
  func.func @transform_5(%arg0: i32, %arg1: i32) -> (i32, i32) {
    %c0_i32 = arith.constant 0 : i32
    %c0_i32_0 = arith.constant 0 : i32
    return %arg0, %c0_i32 : i32, i32
  }
}

</mosaic_0001>

<llo_original>
// kernel: tpu_custom_call.1
$region0: #{tpu_custom_call.1}
  #allocation0 [shape = 'u32[]', space=smem, size = 0x4, offset = 0x4, fixed_abs, tag = 'smem constant byte address 0x4 - core index']
  #allocation1 [shape = 'u32[144,128]{1,0:T(1,128)}', space=vmem, size = 0x12000, scoped, tag = 'internal scratch']
  #allocation2 [shape = 'f32[8,128]{1,0:T(8,128)}', space=vmem, size = 0x1000, scoped, tag = 'scratch operand']
  %s0 = inlined_call_operand.hbm [shape: f32[8,1024], index: 0, kind: input, shape index: {}]
  %s1 = inlined_call_operand.hbm [shape: f32[1024,128], index: 1, kind: input, shape index: {}]
  %s2 = inlined_call_operand.vmem [shape: f32[1,128], index: 2, kind: input, shape index: {}]
  %s3 = inlined_call_operand.hbm [shape: f32[128,128], index: 3, kind: input, shape index: {}]
  %s4 = inlined_call_operand.vmem [shape: f32[1,128], index: 4, kind: input, shape index: {}]
  %s5 = inlined_call_operand.hbm [shape: f32[8,128], index: 5, kind: output, shape index: {}]
  %s6 = sld [smem:[#allocation0]]
  $region73: #{tpu_custom_call.1} parent=0
    _
  %s8 = ssub.s32 1, %s6
  %s9 = scalar_select 0, %s8, %s6
  $region1: #{tpu_custom_call.1} parent=0
    #allocation3 [shape = 'u8[32768]{0}', space=vmem, size = 0x8000, scoped, tag = 'input window, operand 0']
    #allocation4 [shape = 's32[2]{0}', space=sflag, size = 0x8, scoped, tag = 'scoped memory for tpu_custom_call.1']
    #allocation5 [shape = 's32[2]{0}', space=sflag, size = 0x8, scoped, tag = 'scoped memory for tpu_custom_call.1']
    #allocation6 [shape = 'u8[524288]{0}', space=vmem, size = 0x80000, scoped, tag = 'input window, operand 1']
    #allocation7 [shape = 's32[2]{0}', space=sflag, size = 0x8, scoped, tag = 'scoped memory for tpu_custom_call.1']
    #allocation8 [shape = 'u8[65536]{0}', space=vmem, size = 0x10000, scoped, tag = 'input window, operand 3, single buffered']
    #allocation9 [shape = 'u8[4096]{0}', space=vmem, size = 0x1000, scoped, tag = 'output window, operand 0, single buffered']
    %10 = vsyncpa [#allocation4], 0
    %s11 = scalar_lea.sflag [#allocation4], 1
    %12 = vsyncpa %s11, 0
    %13 = vsyncpa [#allocation7], 0
    %s14 = scalar_lea.sflag [#allocation7], 1
    %15 = vsyncpa %s14, 0
    %16 = vsyncpa [#allocation5], 0
    loop: start=0, step=1, limit=4
    $region2: #{tpu_custom_call.1} parent=1 // loop_pre_header
      _
    $region3: #{tpu_custom_call.1} parent=1 // loop_header
      %s18 = sphi 0, %s22
      %p19 = scmp.ge.s32.totalorder %s18, 4
      %s25 = sphi 0, %s37
      %s26 = sphi 0, %s33
      %s27 = sphi 0, %s25
      %s28 = sphi 0, %s26
      %s29 = sphi 0, %s27
      %s30 = sphi 0, %s28
      %s42 = sphi 0, %s44
      %s45 = sphi 0, %s42
      %s46 = sphi 0, %s45
      %s62 = sphi 0, %s46
      %s68 = sphi 0, %s70
      %s71 = sphi 0, %s68
      %s72 = sphi 0, %s71
      %s88 = sphi 0, %s72
      %s92 = sphi 0, %s92
      %s94 = sphi 0, %s92
      %s95 = sphi 0, %s94
      %s109 = sphi 0, %s95
      %s113 = sphi 0, %s113
      %s115 = sphi 0, %s113
      %s116 = sphi 0, %s115
      %s130 = sphi 0, %s116
      %s134 = sphi 0, %s134
      %s136 = sphi 0, %s134
      %s137 = sphi 0, %s136
      %s151 = sphi 0, %s137
      %s157 = sphi 0, %s159
      %s160 = sphi 0, %s157
      %s161 = sphi 0, %s160
      %s177 = sphi 0, %s161
    $region4: #{tpu_custom_call.1} parent=1 // loop_header_branch
      %21 = sbr.rel (%p19) target = $region8
    $region5: #{tpu_custom_call.1} parent=1 // loop_body
      %s23 = ssub.s32 %s18, 1
      %s24 = ssub.s32 %s18, 2
      %s31 = sadd.s32 1, %s26
      %p32 = scmp.ge.s32.totalorder %s31, 2
      %s33 = scalar_select %p32, 0, %s31
      %s34 = sadd.s32 1, %s25
      %s35 = scalar_select %p32, %s34, %s25
      %p36 = scmp.ge.s32.totalorder %s35, 1
      %s37 = scalar_select %p36, 0, %s35
      %s38 = ssub.s32 %s25, %s37
      %s39 = ssub.s32 %s26, %s33
      %s40 = sor.u32 %s38, %s39
      %p41 = scmp.eq.s32.totalorder %s40, 0
      %s43 = sadd.s32 %s42, 1
      %s44 = scalar_select %p41, %s42, %s43
      %p47 = pneg %p41
      %p48 = scmp.eq.s32.totalorder %s18, 1
      %p49 = por %p47, %p48
      %p50 = scmp.ne.s32.totalorder %s42, %s45
      %p51 = scmp.eq.s32.totalorder %s18, 0
      %p52 = por %p50, %p51
      %p53 = scmp.ne.s32.totalorder %s42, %s45
      %p54 = scmp.eq.s32.totalorder %s23, 1
      %p55 = por %p53, %p54
      %p56 = scmp.ne.s32.totalorder %s45, %s46
      %p57 = scmp.eq.s32.totalorder %s23, 0
      %p58 = por %p56, %p57
      %p59 = scmp.ne.s32.totalorder %s45, %s46
      %p60 = scmp.eq.s32.totalorder %s24, 1
      %p61 = por %p59, %p60
      %p63 = scmp.ne.s32.totalorder %s46, %s62
      %p64 = scmp.eq.s32.totalorder %s24, 0
      %p65 = por %p63, %p64
      %s66 = ssub.s32 %s26, %s33
      %p67 = scmp.eq.s32.totalorder %s66, 0
      %s69 = sadd.s32 %s68, 1
      %s70 = scalar_select %p67, %s68, %s69
      %p73 = pneg %p67
      %p74 = scmp.eq.s32.totalorder %s18, 1
      %p75 = por %p73, %p74
      %p76 = scmp.ne.s32.totalorder %s68, %s71
      %p77 = scmp.eq.s32.totalorder %s18, 0
      %p78 = por %p76, %p77
      %p79 = scmp.ne.s32.totalorder %s68, %s71
      %p80 = scmp.eq.s32.totalorder %s23, 1
      %p81 = por %p79, %p80
      %p82 = scmp.ne.s32.totalorder %s71, %s72
      %p83 = scmp.eq.s32.totalorder %s23, 0
      %p84 = por %p82, %p83
      %p85 = scmp.ne.s32.totalorder %s71, %s72
      %p86 = scmp.eq.s32.totalorder %s24, 1
      %p87 = por %p85, %p86
      %p89 = scmp.ne.s32.totalorder %s72, %s88
      %p90 = scmp.eq.s32.totalorder %s24, 0
      %p91 = por %p89, %p90
      %s93 = sadd.s32 %s92, 1
      %p96 = scmp.eq.s32.totalorder %s18, 1
      %p97 = scmp.ne.s32.totalorder %s92, %s94
      %p98 = scmp.eq.s32.totalorder %s18, 0
      %p99 = por %p97, %p98
      %p100 = scmp.ne.s32.totalorder %s92, %s94
      %p101 = scmp.eq.s32.totalorder %s23, 1
      %p102 = por %p100, %p101
      %p103 = scmp.ne.s32.totalorder %s94, %s95
      %p104 = scmp.eq.s32.totalorder %s23, 0
      %p105 = por %p103, %p104
      %p106 = scmp.ne.s32.totalorder %s94, %s95
      %p107 = scmp.eq.s32.totalorder %s24, 1
      %p108 = por %p106, %p107
      %p110 = scmp.ne.s32.totalorder %s95, %s109
      %p111 = scmp.eq.s32.totalorder %s24, 0
      %p112 = por %p110, %p111
      %s114 = sadd.s32 %s113, 1
      %p117 = scmp.eq.s32.totalorder %s18, 1
      %p118 = scmp.ne.s32.totalorder %s113, %s115
      %p119 = scmp.eq.s32.totalorder %s18, 0
      %p120 = por %p118, %p119
      %p121 = scmp.ne.s32.totalorder %s113, %s115
      %p122 = scmp.eq.s32.totalorder %s23, 1
      %p123 = por %p121, %p122
      %p124 = scmp.ne.s32.totalorder %s115, %s116
      %p125 = scmp.eq.s32.totalorder %s23, 0
      %p126 = por %p124, %p125
      %p127 = scmp.ne.s32.totalorder %s115, %s116
      %p128 = scmp.eq.s32.totalorder %s24, 1
      %p129 = por %p127, %p128
      %p131 = scmp.ne.s32.totalorder %s116, %s130
      %p132 = scmp.eq.s32.totalorder %s24, 0
      %p133 = por %p131, %p132
      %s135 = sadd.s32 %s134, 1
      %p138 = scmp.eq.s32.totalorder %s18, 1
      %p139 = scmp.ne.s32.totalorder %s134, %s136
      %p140 = scmp.eq.s32.totalorder %s18, 0
      %p141 = por %p139, %p140
      %p142 = scmp.ne.s32.totalorder %s134, %s136
      %p143 = scmp.eq.s32.totalorder %s23, 1
      %p144 = por %p142, %p143
      %p145 = scmp.ne.s32.totalorder %s136, %s137
      %p146 = scmp.eq.s32.totalorder %s23, 0
      %p147 = por %p145, %p146
      %p148 = scmp.ne.s32.totalorder %s136, %s137
      %p149 = scmp.eq.s32.totalorder %s24, 1
      %p150 = por %p148, %p149
      %p152 = scmp.ne.s32.totalorder %s137, %s151
      %p153 = scmp.eq.s32.totalorder %s24, 0
      %p154 = por %p152, %p153
      %s155 = ssub.s32 %s25, %s37
      %p156 = scmp.eq.s32.totalorder %s155, 0
      %s158 = sadd.s32 %s157, 1
      %s159 = scalar_select %p156, %s157, %s158
      %p162 = pneg %p156
      %p163 = scmp.eq.s32.totalorder %s18, 1
      %p164 = por %p162, %p163
      %p165 = scmp.ne.s32.totalorder %s157, %s160
      %p166 = scmp.eq.s32.totalorder %s18, 0
      %p167 = por %p165, %p166
      %p168 = scmp.ne.s32.totalorder %s157, %s160
      %p169 = scmp.eq.s32.totalorder %s23, 1
      %p170 = por %p168, %p169
      %p171 = scmp.ne.s32.totalorder %s160, %s161
      %p172 = scmp.eq.s32.totalorder %s23, 0
      %p173 = por %p171, %p172
      %p174 = scmp.ne.s32.totalorder %s160, %s161
      %p175 = scmp.eq.s32.totalorder %s24, 1
      %p176 = por %p174, %p175
      %p178 = scmp.ne.s32.totalorder %s161, %s177
      %p179 = scmp.eq.s32.totalorder %s24, 0
      %p180 = por %p178, %p179
      %p181 = scmp.le.s32.totalorder 1, %s18
      %p182 = scmp.lt.s32.totalorder %s18, 3
      %p183 = pnand %p181, %p182
      %p184 = pneg %p183
      // Predicated region
      $region9: #{tpu_custom_call.1} parent=5 // pred_check
        _
      $region10: #{tpu_custom_call.1} parent=5 // pred_check_branch
        %186 = sbr.rel (%p183) target = $region12
      $region11: #{tpu_custom_call.1} parent=5 // pred_region
        %s187 = ssub.s32 %s18, 1
        // Predicated region
        $region13: #{tpu_custom_call.1} parent=11 // pred_check
          %p188 = pneg %p105
        $region14: #{tpu_custom_call.1} parent=11 // pred_check_branch
          %190 = sbr.rel (%p188) target = $region16
        $region15: #{tpu_custom_call.1} parent=11 // pred_region
          _
        $region16: #{tpu_custom_call.1} parent=11 // pred_fallthru
          _
        // Predicated region
        $region17: #{tpu_custom_call.1} parent=11 // pred_check
          %p191 = pneg %p126
        $region18: #{tpu_custom_call.1} parent=11 // pred_check_branch
          %193 = sbr.rel (%p191) target = $region20
        $region19: #{tpu_custom_call.1} parent=11 // pred_region
          %s195 = ssub.s32 2048, 2048
          %196 = vsyncadd [#allocation7], %s195
          %s197 = sshll.u32 [#allocation8], 4
          %s198 = int_to_ptr.vmem [resolvable:$true] %s197
          %203 = dma.hbm_to_vmem [thread:$0]  %s3, 2048, %s198, [#allocation7], 128, 128, 8
        $region20: #{tpu_custom_call.1} parent=11 // pred_fallthru
          _
        // Predicated region
        $region21: #{tpu_custom_call.1} parent=11 // pred_check
          %p204 = pneg %p147
        $region22: #{tpu_custom_call.1} parent=11 // pred_check_branch
          %206 = sbr.rel (%p204) target = $region24
        $region23: #{tpu_custom_call.1} parent=11 // pred_region
          _
        $region24: #{tpu_custom_call.1} parent=11 // pred_fallthru
          _
      $region12: #{tpu_custom_call.1} parent=5 // pred_fallthru
        _
      %p207 = scmp.lt.s32.totalorder %s18, 2
      // Predicated region
      $region25: #{tpu_custom_call.1} parent=5 // pred_check
        %p208 = pneg %p207
      $region26: #{tpu_custom_call.1} parent=5 // pred_check_branch
        %210 = sbr.rel (%p208) target = $region28
      $region27: #{tpu_custom_call.1} parent=5 // pred_region
        // Predicated region
        $region29: #{tpu_custom_call.1} parent=27 // pred_check
          %p211 = pneg %p52
        $region30: #{tpu_custom_call.1} parent=27 // pred_check_branch
          %213 = sbr.rel (%p211) target = $region32
        $region31: #{tpu_custom_call.1} parent=27 // pred_region
          %s214 = sand.u32 %s42, 1
          %s215 = scalar_lea.sflag [#allocation4], %s214
          %s216 = sand.u32 %s42, 1
          %s217 = smul.addr %s216, 32
          %s218 = scalar_lea.vmem [#allocation3], %s217
          %s219 = smul.u32 4, %s26
          %s221 = ssub.s32 512, 512
          %222 = vsyncadd %s215, %s221
          %s223 = smul.addr %s25, 8
          %s224 = sadd.s32 %s219, %s223
          %s225 = smul.addr %s224, 128
          %s226 = scalar_lea.hbm %s0, %s225
          %s228 = sshll.u32 %s218, 4
          %s229 = int_to_ptr.vmem [resolvable:$true] %s228
          %231 = dma.hbm_to_vmem [thread:$0]  %s226, 512, %s229, %s215
        $region32: #{tpu_custom_call.1} parent=27 // pred_fallthru
          _
        // Predicated region
        $region33: #{tpu_custom_call.1} parent=27 // pred_check
          %p232 = pneg %p78
        $region34: #{tpu_custom_call.1} parent=27 // pred_check_branch
          %234 = sbr.rel (%p232) target = $region36
        $region35: #{tpu_custom_call.1} parent=27 // pred_region
          %s235 = sand.u32 %s18, 1
          %s236 = scalar_lea.sflag [#allocation7], %s235
          %s237 = sand.u32 %s68, 1
          %s238 = smul.addr %s237, 512
          %s239 = scalar_lea.vmem [#allocation6], %s238
          %s240 = smul.u32 64, %s26
          %s242 = ssub.s32 8192, 8192
          %243 = vsyncadd %s236, %s242
          %s244 = smul.addr %s240, 128
          %s245 = scalar_lea.hbm %s1, %s244
          %s246 = sshll.u32 %s239, 4
          %s247 = int_to_ptr.vmem [resolvable:$true] %s246
          %252 = dma.hbm_to_vmem [thread:$0]  %s245, 8192, %s247, %s236, 128, 128, 8
        $region36: #{tpu_custom_call.1} parent=27 // pred_fallthru
          _
      $region28: #{tpu_custom_call.1} parent=5 // pred_fallthru
        _
      %p253 = scmp.le.s32.totalorder 1, %s18
      %p254 = scmp.lt.s32.totalorder %s18, 3
      %p255 = pnand %p253, %p254
      %p256 = pneg %p255
      // Predicated region
      $region37: #{tpu_custom_call.1} parent=5 // pred_check
        _
      $region38: #{tpu_custom_call.1} parent=5 // pred_check_branch
        %258 = sbr.rel (%p255) target = $region40
      $region39: #{tpu_custom_call.1} parent=5 // pred_region
        %s259 = ssub.s32 %s18, 1
        %s260 = sand.u32 %s45, 1
        %s261 = scalar_lea.sflag [#allocation4], %s260
        %s262 = sand.u32 %s45, 1
        %s263 = smul.addr %s262, 32
        %s264 = scalar_lea.vmem [#allocation3], %s263
        // Predicated region
        $region41: #{tpu_custom_call.1} parent=39 // pred_check
          %p265 = pneg %p58
        $region42: #{tpu_custom_call.1} parent=39 // pred_check_branch
          %267 = sbr.rel (%p265) target = $region44
        $region43: #{tpu_custom_call.1} parent=39 // pred_region
          %268 = dma.done %s261, 512
        $region44: #{tpu_custom_call.1} parent=39 // pred_fallthru
          _
        %s269 = sand.u32 %s23, 1
        %s270 = scalar_lea.sflag [#allocation7], %s269
        %s271 = sand.u32 %s71, 1
        %s272 = smul.addr %s271, 512
        %s273 = scalar_lea.vmem [#allocation6], %s272
        // Predicated region
        $region45: #{tpu_custom_call.1} parent=39 // pred_check
          %p274 = pneg %p84
        $region46: #{tpu_custom_call.1} parent=39 // pred_check_branch
          %276 = sbr.rel (%p274) target = $region48
        $region47: #{tpu_custom_call.1} parent=39 // pred_region
          %277 = dma.done %s270, 8192
        $region48: #{tpu_custom_call.1} parent=39 // pred_fallthru
          _
        // Predicated region
        $region49: #{tpu_custom_call.1} parent=39 // pred_check
          %p278 = pneg %p126
        $region50: #{tpu_custom_call.1} parent=39 // pred_check_branch
          %280 = sbr.rel (%p278) target = $region52
        $region51: #{tpu_custom_call.1} parent=39 // pred_region
          %281 = dma.done [#allocation7], 2048
        $region52: #{tpu_custom_call.1} parent=39 // pred_fallthru
          _
        %s282 = sand.u32 %s45, 1
        %s283 = scalar_lea.sflag [#allocation4], %s282
        %s284 = sand.u32 %s45, 1
        %s285 = smul.addr %s284, 32
        %s286 = scalar_lea.vmem [#allocation3], %s285
        %p287 = pneg %p58
        %p288 = pneg %p55
        %s289 = sand.u32 %s23, 1
        %s290 = scalar_lea.sflag [#allocation7], %s289
        %s291 = sand.u32 %s71, 1
        %s292 = smul.addr %s291, 512
        %s293 = scalar_lea.vmem [#allocation6], %s292
        %p294 = pneg %p84
        %p295 = pneg %p81
        %p296 = pneg %p105
        %p297 = pneg %p102
        %p298 = pneg %p126
        %p299 = pneg %p123
        %p300 = pneg %p147
        %p301 = pneg %p144
        %p302 = pneg %p173
        %p303 = pneg %p170
        %s304 = smul.u32 4, %s28
        %s305 = smul.u32 64, %s28
        %p306 = scmp.eq.s32.totalorder %s28, 0
        // Predicated region
        $region53: #{tpu_custom_call.1} parent=39 // pred_check
          %p307 = pneg %p306
        $region54: #{tpu_custom_call.1} parent=39 // pred_check_branch
          %309 = sbr.rel (%p307) target = $region56
        $region55: #{tpu_custom_call.1} parent=39 // pred_region
          %310 = vst [vmem:[#allocation2] sm:$0xff] 0.0
        $region56: #{tpu_custom_call.1} parent=39 // pred_fallthru
          _
        %v311 = vld [vmem:[#allocation2] sm:$0xff]
        %v312 = vld [vmem:[%s264] sm:$0xff]
        %v313 = vld [vmem:[%s264 + $0x8] sm:$0xff]
        %v314 = vld [vmem:[%s264 + $0x10] sm:$0xff]
        %v315 = vld [vmem:[%s264 + $0x18] sm:$0xff]
        %v316 = vld [vmem:[%s273] sm:$0xff]
        %v317 = vld [vmem:[%s273 + $0x8] sm:$0xff]
        %v318 = vld [vmem:[%s273 + $0x10] sm:$0xff]
        %v319 = vld [vmem:[%s273 + $0x18] sm:$0xff]
        %v320 = vld [vmem:[%s273 + $0x20] sm:$0xff]
        %v321 = vld [vmem:[%s273 + $0x28] sm:$0xff]
        %v322 = vld [vmem:[%s273 + $0x30] sm:$0xff]
        %v323 = vld [vmem:[%s273 + $0x38] sm:$0xff]
        %v324 = vld [vmem:[%s273 + $0x40] sm:$0xff]
        %v325 = vld [vmem:[%s273 + $0x48] sm:$0xff]
        %v326 = vld [vmem:[%s273 + $0x50] sm:$0xff]
        %v327 = vld [vmem:[%s273 + $0x58] sm:$0xff]
        %v328 = vld [vmem:[%s273 + $0x60] sm:$0xff]
        %v329 = vld [vmem:[%s273 + $0x68] sm:$0xff]
        %v330 = vld [vmem:[%s273 + $0x70] sm:$0xff]
        %v331 = vld [vmem:[%s273 + $0x78] sm:$0xff]
        %v332 = vld [vmem:[%s273 + $0x80] sm:$0xff]
        %v333 = vld [vmem:[%s273 + $0x88] sm:$0xff]
        %v334 = vld [vmem:[%s273 + $0x90] sm:$0xff]
        %v335 = vld [vmem:[%s273 + $0x98] sm:$0xff]
        %v336 = vld [vmem:[%s273 + $0xa0] sm:$0xff]
        %v337 = vld [vmem:[%s273 + $0xa8] sm:$0xff]
        %v338 = vld [vmem:[%s273 + $0xb0] sm:$0xff]
        %v339 = vld [vmem:[%s273 + $0xb8] sm:$0xff]
        %v340 = vld [vmem:[%s273 + $0xc0] sm:$0xff]
        %v341 = vld [vmem:[%s273 + $0xc8] sm:$0xff]
        %v342 = vld [vmem:[%s273 + $0xd0] sm:$0xff]
        %v343 = vld [vmem:[%s273 + $0xd8] sm:$0xff]
        %v344 = vld [vmem:[%s273 + $0xe0] sm:$0xff]
        %v345 = vld [vmem:[%s273 + $0xe8] sm:$0xff]
        %v346 = vld [vmem:[%s273 + $0xf0] sm:$0xff]
        %v347 = vld [vmem:[%s273 + $0xf8] sm:$0xff]
        %v348 = vld [vmem:[%s273 + $0x100] sm:$0xff]
        %v349 = vld [vmem:[%s273 + $0x108] sm:$0xff]
        %v350 = vld [vmem:[%s273 + $0x110] sm:$0xff]
        %v351 = vld [vmem:[%s273 + $0x118] sm:$0xff]
        %v352 = vld [vmem:[%s273 + $0x120] sm:$0xff]
        %v353 = vld [vmem:[%s273 + $0x128] sm:$0xff]
        %v354 = vld [vmem:[%s273 + $0x130] sm:$0xff]
        %v355 = vld [vmem:[%s273 + $0x138] sm:$0xff]
        %v356 = vld [vmem:[%s273 + $0x140] sm:$0xff]
        %v357 = vld [vmem:[%s273 + $0x148] sm:$0xff]
        %v358 = vld [vmem:[%s273 + $0x150] sm:$0xff]
        %v359 = vld [vmem:[%s273 + $0x158] sm:$0xff]
        %v360 = vld [vmem:[%s273 + $0x160] sm:$0xff]
        %v361 = vld [vmem:[%s273 + $0x168] sm:$0xff]
        %v362 = vld [vmem:[%s273 + $0x170] sm:$0xff]
        %v363 = vld [vmem:[%s273 + $0x178] sm:$0xff]
        %v364 = vld [vmem:[%s273 + $0x180] sm:$0xff]
        %v365 = vld [vmem:[%s273 + $0x188] sm:$0xff]
        %v366 = vld [vmem:[%s273 + $0x190] sm:$0xff]
        %v367 = vld [vmem:[%s273 + $0x198] sm:$0xff]
        %v368 = vld [vmem:[%s273 + $0x1a0] sm:$0xff]
        %v369 = vld [vmem:[%s273 + $0x1a8] sm:$0xff]
        %v370 = vld [vmem:[%s273 + $0x1b0] sm:$0xff]
        %v371 = vld [vmem:[%s273 + $0x1b8] sm:$0xff]
        %v372 = vld [vmem:[%s273 + $0x1c0] sm:$0xff]
        %v373 = vld [vmem:[%s273 + $0x1c8] sm:$0xff]
        %v374 = vld [vmem:[%s273 + $0x1d0] sm:$0xff]
        %v375 = vld [vmem:[%s273 + $0x1d8] sm:$0xff]
        %v376 = vld [vmem:[%s273 + $0x1e0] sm:$0xff]
        %v377 = vld [vmem:[%s273 + $0x1e8] sm:$0xff]
        %v378 = vld [vmem:[%s273 + $0x1f0] sm:$0xff]
        %v379 = vld [vmem:[%s273 + $0x1f8] sm:$0xff]
        %380 = vmatprep.subr.mxu0 0.0
        %381 = vmatpush1.msra.mxu0 %v316
        %382 = vmatprep.subr.mxu0 0.0
        %383 = vmatpush1.msra.mxu0 %v317
        %384 = vmatprep.subr.mxu0 0.0
        %385 = vmatpush1.msra.mxu0 %v318
        %386 = vmatprep.subr.mxu0 0.0
        %387 = vmatpush1.msra.mxu0 %v319
        %388 = vmatprep.subr.mxu0 0.0
        %389 = vmatpush1.msra.mxu0 %v320
        %390 = vmatprep.subr.mxu0 0.0
        %391 = vmatpush1.msra.mxu0 %v321
        %392 = vmatprep.subr.mxu0 0.0
        %393 = vmatpush1.msra.mxu0 %v322
        %394 = vmatprep.subr.mxu0 0.0
        %395 = vmatpush1.msra.mxu0 %v323
        %396 = vmatprep.subr.mxu0 0.0
        %397 = vmatpush1.msra.mxu0 %v324
        %398 = vmatprep.subr.mxu0 0.0
        %399 = vmatpush1.msra.mxu0 %v325
        %400 = vmatprep.subr.mxu0 0.0
        %401 = vmatpush1.msra.mxu0 %v326
        %402 = vmatprep.subr.mxu0 0.0
        %403 = vmatpush1.msra.mxu0 %v327
        %404 = vmatprep.subr.mxu0 0.0
        %405 = vmatpush1.msra.mxu0 %v328
        %406 = vmatprep.subr.mxu0 0.0
        %407 = vmatpush1.msra.mxu0 %v329
        %408 = vmatprep.subr.mxu0 0.0
        %409 = vmatpush1.msra.mxu0 %v330
        %410 = vmatprep.subr.mxu0 0.0
        %411 = vmatpush1.msra.mxu0 %v331
        %412 = vmatprep.subr.mxu0 0.0
        %413 = vmatpush1.msra.mxu0 %v332
        %414 = vmatprep.subr.mxu0 0.0
        %415 = vmatpush1.msra.mxu0 %v333
        %416 = vmatprep.subr.mxu0 0.0
        %417 = vmatpush1.msra.mxu0 %v334
        %418 = vmatprep.subr.mxu0 0.0
        %419 = vmatpush1.msra.mxu0 %v335
        %420 = vmatprep.subr.mxu0 0.0
        %421 = vmatpush1.msra.mxu0 %v336
        %422 = vmatprep.subr.mxu0 0.0
        %423 = vmatpush1.msra.mxu0 %v337
        %424 = vmatprep.subr.mxu0 0.0
        %425 = vmatpush1.msra.mxu0 %v338
        %426 = vmatprep.subr.mxu0 0.0
        %427 = vmatpush1.msra.mxu0 %v339
        %428 = vmatprep.subr.mxu0 0.0
        %429 = vmatpush1.msra.mxu0 %v340
        %430 = vmatprep.subr.mxu0 0.0
        %431 = vmatpush1.msra.mxu0 %v341
        %432 = vmatprep.subr.mxu0 0.0
        %433 = vmatpush1.msra.mxu0 %v342
        %434 = vmatprep.subr.mxu0 0.0
        %435 = vmatpush1.msra.mxu0 %v343
        %436 = vmatprep.subr.mxu0 0.0
        %437 = vmatpush1.msra.mxu0 %v344
        %438 = vmatprep.subr.mxu0 0.0
        %439 = vmatpush1.msra.mxu0 %v345
        %440 = vmatprep.subr.mxu0 0.0
        %441 = vmatpush1.msra.mxu0 %v346
        %442 = vmatprep.subr.mxu0 0.0
        %443 = vmatpush1.msra.mxu0 %v347
        %444 = vmatprep.mubr.f32.mxu0 %v313
        %445 = vmatmul.mubr.f32.gmra.mrb[0].mxu0 %v312
        %v446 = vpop.f32.mrb[0].mxu0
        %v447 = vadd.f32 0.0, %v446
        %v448 = vpop.f32.mrb[0].mxu0
        %449 = vdwg.mxu0
        %450 = vmatprep.subr.mxu0 0.0
        %451 = vmatpush1.msra.mxu0 %v348
        %452 = vmatprep.subr.mxu0 0.0
        %453 = vmatpush1.msra.mxu0 %v349
        %454 = vmatprep.subr.mxu0 0.0
        %455 = vmatpush1.msra.mxu0 %v350
        %456 = vmatprep.subr.mxu0 0.0
        %457 = vmatpush1.msra.mxu0 %v351
        %458 = vmatprep.subr.mxu0 0.0
        %459 = vmatpush1.msra.mxu0 %v352
        %460 = vmatprep.subr.mxu0 0.0
        %461 = vmatpush1.msra.mxu0 %v353
        %462 = vmatprep.subr.mxu0 0.0
        %463 = vmatpush1.msra.mxu0 %v354
        %464 = vmatprep.subr.mxu0 0.0
        %465 = vmatpush1.msra.mxu0 %v355
        %466 = vmatprep.subr.mxu0 0.0
        %467 = vmatpush1.msra.mxu0 %v356
        %468 = vmatprep.subr.mxu0 0.0
        %469 = vmatpush1.msra.mxu0 %v357
        %470 = vmatprep.subr.mxu0 0.0
        %471 = vmatpush1.msra.mxu0 %v358
        %472 = vmatprep.subr.mxu0 0.0
        %473 = vmatpush1.msra.mxu0 %v359
        %474 = vmatprep.subr.mxu0 0.0
        %475 = vmatpush1.msra.mxu0 %v360
        %476 = vmatprep.subr.mxu0 0.0
        %477 = vmatpush1.msra.mxu0 %v361
        %478 = vmatprep.subr.mxu0 0.0
        %479 = vmatpush1.msra.mxu0 %v362
        %480 = vmatprep.subr.mxu0 0.0
        %481 = vmatpush1.msra.mxu0 %v363
        %482 = vmatprep.subr.mxu0 0.0
        %483 = vmatpush1.msra.mxu0 %v364
        %484 = vmatprep.subr.mxu0 0.0
        %485 = vmatpush1.msra.mxu0 %v365
        %486 = vmatprep.subr.mxu0 0.0
        %487 = vmatpush1.msra.mxu0 %v366
        %488 = vmatprep.subr.mxu0 0.0
        %489 = vmatpush1.msra.mxu0 %v367
        %490 = vmatprep.subr.mxu0 0.0
        %491 = vmatpush1.msra.mxu0 %v368
        %492 = vmatprep.subr.mxu0 0.0
        %493 = vmatpush1.msra.mxu0 %v369
        %494 = vmatprep.subr.mxu0 0.0
        %495 = vmatpush1.msra.mxu0 %v370
        %496 = vmatprep.subr.mxu0 0.0
        %497 = vmatpush1.msra.mxu0 %v371
        %498 = vmatprep.subr.mxu0 0.0
        %499 = vmatpush1.msra.mxu0 %v372
        %500 = vmatprep.subr.mxu0 0.0
        %501 = vmatpush1.msra.mxu0 %v373
        %502 = vmatprep.subr.mxu0 0.0
        %503 = vmatpush1.msra.mxu0 %v374
        %504 = vmatprep.subr.mxu0 0.0
        %505 = vmatpush1.msra.mxu0 %v375
        %506 = vmatprep.subr.mxu0 0.0
        %507 = vmatpush1.msra.mxu0 %v376
        %508 = vmatprep.subr.mxu0 0.0
        %509 = vmatpush1.msra.mxu0 %v377
        %510 = vmatprep.subr.mxu0 0.0
        %511 = vmatpush1.msra.mxu0 %v378
        %512 = vmatprep.subr.mxu0 0.0
        %513 = vmatpush1.msra.mxu0 %v379
        %514 = vmatprep.mubr.f32.mxu0 %v315
        %515 = vmatmul.mubr.f32.gmra.mrb[0].mxu0 %v314
        %v516 = vpop.f32.mrb[0].mxu0
        %v517 = vadd.f32 %v447, %v516
        %v518 = vpop.f32.mrb[0].mxu0
        %519 = vdwg.mxu0
        %v520 = vadd.f32 %v311, %v517
        %521 = vst [vmem:[#allocation2] sm:$0xff] %v520
        %p522 = scmp.eq.s32.totalorder %s28, 1
        // Predicated region
        $region57: #{tpu_custom_call.1} parent=39 // pred_check
          %p523 = pneg %p522
        $region58: #{tpu_custom_call.1} parent=39 // pred_check_branch
          %525 = sbr.rel (%p523) target = $region60
        $region59: #{tpu_custom_call.1} parent=39 // pred_region
          %v526 = vld [vmem:[#allocation2] sm:$0xff]
          %v527 = vld [vmem:[%s2] sm:$0x1]
          %v529 = vlaneseq
          %v530 = vshrl.u32 %v529, 7
          %v531 = vsub.s32 0, %v530
          %v532 = vrot.slane %v527, %v531
          %v534 = vadd.f32 %v526, %v532
          %v535 = vmax.f32 %v534, 0.0
          %v536 = vld [vmem:[#allocation8] sm:$0xff]
          %v537 = vld [vmem:[#allocation8 + $0x8] sm:$0xff]
          %v538 = vld [vmem:[#allocation8 + $0x10] sm:$0xff]
          %v539 = vld [vmem:[#allocation8 + $0x18] sm:$0xff]
          %v540 = vld [vmem:[#allocation8 + $0x20] sm:$0xff]
          %v541 = vld [vmem:[#allocation8 + $0x28] sm:$0xff]
          %v542 = vld [vmem:[#allocation8 + $0x30] sm:$0xff]
          %v543 = vld [vmem:[#allocation8 + $0x38] sm:$0xff]
          %v544 = vld [vmem:[#allocation8 + $0x40] sm:$0xff]
          %v545 = vld [vmem:[#allocation8 + $0x48] sm:$0xff]
          %v546 = vld [vmem:[#allocation8 + $0x50] sm:$0xff]
          %v547 = vld [vmem:[#allocation8 + $0x58] sm:$0xff]
          %v548 = vld [vmem:[#allocation8 + $0x60] sm:$0xff]
          %v549 = vld [vmem:[#allocation8 + $0x68] sm:$0xff]
          %v550 = vld [vmem:[#allocation8 + $0x70] sm:$0xff]
          %v551 = vld [vmem:[#allocation8 + $0x78] sm:$0xff]
          %v552 = vld [vmem:[%s4] sm:$0x1]
          %v554 = vlaneseq
          %v555 = vshrl.u32 %v554, 7
          %v556 = vsub.s32 0, %v555
          %v557 = vrot.slane %v552, %v556
          %559 = vmatprep.subr.mxu0 0.0
          %560 = vmatpush1.msra.mxu0 %v536
          %561 = vmatprep.subr.mxu0 0.0
          %562 = vmatpush1.msra.mxu0 %v537
          %563 = vmatprep.subr.mxu0 0.0
          %564 = vmatpush1.msra.mxu0 %v538
          %565 = vmatprep.subr.mxu0 0.0
          %566 = vmatpush1.msra.mxu0 %v539
          %567 = vmatprep.subr.mxu0 0.0
          %568 = vmatpush1.msra.mxu0 %v540
          %569 = vmatprep.subr.mxu0 0.0
          %570 = vmatpush1.msra.mxu0 %v541
          %571 = vmatprep.subr.mxu0 0.0
          %572 = vmatpush1.msra.mxu0 %v542
          %573 = vmatprep.subr.mxu0 0.0
          %574 = vmatpush1.msra.mxu0 %v543
          %575 = vmatprep.subr.mxu0 0.0
          %576 = vmatpush1.msra.mxu0 %v544
          %577 = vmatprep.subr.mxu0 0.0
          %578 = vmatpush1.msra.mxu0 %v545
          %579 = vmatprep.subr.mxu0 0.0
          %580 = vmatpush1.msra.mxu0 %v546
          %581 = vmatprep.subr.mxu0 0.0
          %582 = vmatpush1.msra.mxu0 %v547
          %583 = vmatprep.subr.mxu0 0.0
          %584 = vmatpush1.msra.mxu0 %v548
          %585 = vmatprep.subr.mxu0 0.0
          %586 = vmatpush1.msra.mxu0 %v549
          %587 = vmatprep.subr.mxu0 0.0
          %588 = vmatpush1.msra.mxu0 %v550
          %589 = vmatprep.subr.mxu0 0.0
          %590 = vmatpush1.msra.mxu0 %v551
          %591 = vmatprep.subr.mxu0 0.0
          %592 = vmatpush1.msra.mxu0 0.0
          %593 = vmatprep.subr.mxu0 0.0
          %594 = vmatpush1.msra.mxu0 0.0
          %595 = vmatprep.subr.mxu0 0.0
          %596 = vmatpush1.msra.mxu0 0.0
          %597 = vmatprep.subr.mxu0 0.0
          %598 = vmatpush1.msra.mxu0 0.0
          %599 = vmatprep.subr.mxu0 0.0
          %600 = vmatpush1.msra.mxu0 0.0
          %601 = vmatprep.subr.mxu0 0.0
          %602 = vmatpush1.msra.mxu0 0.0
          %603 = vmatprep.subr.mxu0 0.0
          %604 = vmatpush1.msra.mxu0 0.0
          %605 = vmatprep.subr.mxu0 0.0
          %606 = vmatpush1.msra.mxu0 0.0
          %607 = vmatprep.subr.mxu0 0.0
          %608 = vmatpush1.msra.mxu0 0.0
          %609 = vmatprep.subr.mxu0 0.0
          %610 = vmatpush1.msra.mxu0 0.0
          %611 = vmatprep.subr.mxu0 0.0
          %612 = vmatpush1.msra.mxu0 0.0
          %613 = vmatprep.subr.mxu0 0.0
          %614 = vmatpush1.msra.mxu0 0.0
          %615 = vmatprep.subr.mxu0 0.0
          %616 = vmatpush1.msra.mxu0 0.0
          %617 = vmatprep.subr.mxu0 0.0
          %618 = vmatpush1.msra.mxu0 0.0
          %619 = vmatprep.subr.mxu0 0.0
          %620 = vmatpush1.msra.mxu0 0.0
          %621 = vmatprep.subr.mxu0 0.0
          %622 = vmatpush1.msra.mxu0 0.0
          %623 = vmatprep.mubr.f32.mxu0 0.0
          %624 = vmatmul.mubr.f32.gmra.mrb[0].mxu0 %v535
          %v625 = vpop.f32.mrb[0].mxu0
          %v626 = vadd.f32 %v557, %v625
          %v627 = vpop.f32.mrb[0].mxu0
          %628 = vdwg.mxu0
          %v629 = vmax.f32 %v626, 0.0
          %630 = vst [vmem:[#allocation9] sm:$0xff] %v629
        $region60: #{tpu_custom_call.1} parent=39 // pred_fallthru
          _
        // Predicated region
        $region61: #{tpu_custom_call.1} parent=39 // pred_check
          %p631 = pneg %p170
        $region62: #{tpu_custom_call.1} parent=39 // pred_check_branch
          %633 = sbr.rel (%p631) target = $region64
        $region63: #{tpu_custom_call.1} parent=39 // pred_region
          %s635 = ssub.s32 128, 128
          %636 = vsyncadd [#allocation5], %s635
          %s637 = smul.addr %s27, 128
          %s638 = scalar_lea.hbm %s5, %s637
          %s640 = sshll.u32 [#allocation9], 4
          %s641 = int_to_ptr.vmem [resolvable:$true] %s640
          %643 = dma.vmem_to_hbm [thread:$0]  %s641, 128, %s638, [#allocation5]
        $region64: #{tpu_custom_call.1} parent=39 // pred_fallthru
          _
        // Predicated region
        $region65: #{tpu_custom_call.1} parent=39 // pred_check
          %p644 = pneg %p170
        $region66: #{tpu_custom_call.1} parent=39 // pred_check_branch
          %646 = sbr.rel (%p644) target = $region68
        $region67: #{tpu_custom_call.1} parent=39 // pred_region
          %647 = dma.done [#allocation5], 128
        $region68: #{tpu_custom_call.1} parent=39 // pred_fallthru
          _
      $region40: #{tpu_custom_call.1} parent=5 // pred_fallthru
        _
      %p648 = scmp.le.s32.totalorder 2, %s18
      // Predicated region
      $region69: #{tpu_custom_call.1} parent=5 // pred_check
        %p649 = pneg %p648
      $region70: #{tpu_custom_call.1} parent=5 // pred_check_branch
        %651 = sbr.rel (%p649) target = $region72
      $region71: #{tpu_custom_call.1} parent=5 // pred_region
        %s652 = ssub.s32 %s18, 2
      $region72: #{tpu_custom_call.1} parent=5 // pred_fallthru
        _
    $region6: #{tpu_custom_call.1} parent=1 // loop_footer
      %s22 = sadd.s32 1, %s18
    $region7: #{tpu_custom_call.1} parent=1 // loop_footer_branch
      %17 = sbr.rel target = $region3
    $region8: #{tpu_custom_call.1} parent=1 // loop_exit
      _
    %653 = vsyncpa [#allocation4], 1
    %s654 = scalar_lea.sflag [#allocation4], 1
    %655 = vsyncpa %s654, 1
    %656 = vsyncpa [#allocation7], 1
    %s657 = scalar_lea.sflag [#allocation7], 1
    %658 = vsyncpa %s657, 1
    %659 = vsyncpa [#allocation5], 1
    %s660 = scalar_lea.sflag [#allocation5], 1
    %661 = vsyncpa %s660, 1

</llo_original>
